<compile_context>
chip_gen: v7x
topology: tpu7x:2x2x1
jax: 0.10.0
libtpu: 0.0.40
codegen_flags: <defaults>
</compile_context>

<pallas_src>
import jax
import jax.numpy as jnp
from jax import lax
from jax.experimental import pallas as pl
from jax.experimental.pallas import tpu as pltpu


# ----------------------------------------------------------------------------
# Small helpers
# ----------------------------------------------------------------------------
def _cdiv(a, b):
    return -(-a // b)


def _vmem_params():
    """Generation-aware (working-set budget, vmem_limit_bytes, multi_core)."""
    cap = None
    try:
        cap = int(getattr(pltpu.get_tpu_info(), "vmem_capacity_bytes", 0)) or None
    except Exception:
        cap = None

    if cap is not None and cap > 64 * 1024 * 1024:
        # v5e / v6e: 128 MiB physical VMEM per TensorCore.
        budget, limit, multi_core = 80 << 20, 108 << 20, False
    else:
        # v7x (64 MiB per TC) or unknown generation: stay conservative so the
        # vmem limit never equals / exceeds physical VMEM.
        budget, limit, multi_core = 36 << 20, 52 << 20, True

    if cap is not None:
        budget = min(budget, int(cap * 0.55))
        limit = min(limit, int(cap * 0.82))
    return budget, limit, multi_core


# ----------------------------------------------------------------------------
# Block-size selection
# ----------------------------------------------------------------------------
def _choose_blocks(B, N, D, in_isz, out_isz, budget):
    """Pick (path, bt, bm, bd, bk).

    bm: row tile (multiple of 8, or full N), bd: hidden tile (multiple of 128,
    or full D), bk: contraction tile (full N preferred; else multiple of 128).
    Ceil-div grids handle non-divisible N / D / B (partial blocks).
    """
    bm_cands = [N] + [m for m in (4096, 2048, 1024, 512, 256, 128, 64, 32, 16, 8)
                      if m < N]
    bd_cands = [D] + [m for m in (4096, 2048, 1024, 512, 256, 128) if m < D]
    bk_cands = [m for m in (512, 256, 128) if m < N]

    def direct_fp(bt, bm, bd):
        a = bt * bm * N * in_isz          # A row block (double-buffered)
        f = bt * N * bd * in_isz          # full-K feature slab
        o = bt * bm * bd * out_isz
        return 2 * (a + f + o)

    def acc_fp(bt, bm, bk, bd):
        a = bt * bm * bk * in_isz
        f = bt * bk * bd * in_isz
        o = bt * bm * bd * out_isz
        return 2 * (a + f + o) + bt * bm * bd * 4   # + f32 accumulator

    def grow_bt(fp):
        for t in range(B, 0, -1):
            if fp(t) <= budget:
                return t
        return 1

    # Preferred: no K tiling.  Maximize bm first (it controls how many times
    # `features` is re-streamed from HBM), then bd (lane-dense output).
    for bm in bm_cands:
        for bd in bd_cands:
            if direct_fp(1, bm, bd) <= budget:
                return dict(path="direct", bm=bm, bd=bd, bk=N,
                            bt=grow_bt(lambda t: direct_fp(t, bm, bd)))

    # Fallback: tile the contraction dim (only for very large N / D).
    for bm in bm_cands:
        for bk in bk_cands:
            for bd in bd_cands:
                if acc_fp(1, bm, bk, bd) <= budget:
                    return dict(path="acc", bm=bm, bk=bk, bd=bd,
                                bt=grow_bt(lambda t: acc_fp(t, bm, bk, bd)))

    # Minimal tiles always fit.
    return dict(path="acc", bt=1,
                bm=N if N <= 8 else 8,
                bk=bk_cands[-1] if bk_cands else N,
                bd=D if D <= 128 else 128)


# ----------------------------------------------------------------------------
# Kernels
# ----------------------------------------------------------------------------
def _make_direct_kernel(compute_dtype):
    def kernel(a_ref, f_ref, o_ref):
        # a_ref: (Bt, bm, N), f_ref: (Bt, N, bd), o_ref: (Bt, bm, bd)
        a = a_ref[...]
        f = f_ref[...]
        if compute_dtype is not None:
            a = a.astype(compute_dtype)      # in-kernel cast: no extra HBM pass
            f = f.astype(compute_dtype)
        o_ref[...] = jnp.einsum(
            "bij,bjd->bid", a, f, preferred_element_type=jnp.float32
        ).astype(o_ref.dtype)
    return kernel


def _make_acc_kernel(compute_dtype, n_total, bk):
    needs_mask = (n_total % bk) != 0      # partial last contraction block

    def kernel(a_ref, f_ref, o_ref, acc_ref):
        # a_ref: (Bt, bm, bk), f_ref: (Bt, bk, bd), o_ref/acc_ref: (Bt, bm, bd)
        k = pl.program_id(3)

        @pl.when(k == 0)
        def _():
            acc_ref[...] = jnp.zeros_like(acc_ref)

        a = a_ref[...]
        f = f_ref[...]
        if needs_mask:
            base = k * bk
            col = lax.broadcasted_iota(jnp.int32, a.shape, 2)
            a = jnp.where(base + col < n_total, a, 0)
            row = lax.broadcasted_iota(jnp.int32, f.shape, 1)
            f = jnp.where(base + row < n_total, f, 0)
        if compute_dtype is not None:
            a = a.astype(compute_dtype)
            f = f.astype(compute_dtype)

        acc_ref[...] += jnp.einsum(
            "bij,bjd->bid", a, f, preferred_element_type=jnp.float32)

        @pl.when(k == pl.num_programs(3) - 1)
        def _():
            o_ref[...] = acc_ref[...].astype(o_ref.dtype)
    return kernel


# ----------------------------------------------------------------------------
# Wrapper
# ----------------------------------------------------------------------------
def mean_aggregator_forward(features, A, *, compute_dtype=None):
    """Pallas equivalent of MeanAggregator.forward: bmm(A, features).

    compute_dtype: optionally run the MXU in this dtype (e.g. jnp.bfloat16);
    operands are cast per-tile inside the kernel, accumulation stays f32 and
    the output keeps the input dtype.
    """
    B, N, D = features.shape
    assert A.shape == (B, N, N), (
        f"A shape {A.shape} incompatible with features {features.shape}")

    out_dtype = features.dtype
    in_isz = max(jnp.dtype(A.dtype).itemsize, jnp.dtype(features.dtype).itemsize)
    out_isz = jnp.dtype(out_dtype).itemsize

    budget, vmem_limit, multi_core = _vmem_params()
    cfg = _choose_blocks(B, N, D, in_isz, out_isz, budget)
    bt, bm, bd, bk = cfg["bt"], cfg["bm"], cfg["bd"], cfg["bk"]

    # Keep both v7x TensorCores busy when batch packing would collapse the
    # parallel grid to a single step and there is enough work to matter.
    flops = 2 * B * N * N * D
    if (multi_core and B > 1 and flops >= (1 << 26)
            and _cdiv(B, bt) * _cdiv(N, bm) * _cdiv(D, bd) == 1):
        bt = _cdiv(B, 2)

    grid_b, grid_m, grid_d = _cdiv(B, bt), _cdiv(N, bm), _cdiv(D, bd)

    cost = pl.CostEstimate(
        flops=flops,
        transcendentals=0,
        bytes_accessed=(in_isz * B * N * N
                        + in_isz * B * N * D * grid_m
                        + out_isz * B * N * D),
    )

    if cfg["path"] == "direct":
        kernel = _make_direct_kernel(compute_dtype)
        grid = (grid_b, grid_m, grid_d)
        in_specs = [
            pl.BlockSpec((bt, bm, N), lambda b, i, d: (b, i, 0)),   # A
            pl.BlockSpec((bt, N, bd), lambda b, i, d: (b, 0, d)),   # features
        ]
        out_specs = pl.BlockSpec((bt, bm, bd), lambda b, i, d: (b, i, d))
        scratch_shapes = []
        dim_sem = ("parallel", "parallel", "parallel")
    else:
        grid_k = _cdiv(N, bk)
        kernel = _make_acc_kernel(compute_dtype, N, bk)
        grid = (grid_b, grid_m, grid_d, grid_k)       # reduction axis last
        in_specs = [
            pl.BlockSpec((bt, bm, bk), lambda b, i, d, k: (b, i, k)),  # A
            pl.BlockSpec((bt, bk, bd), lambda b, i, d, k: (b, k, d)),  # features
        ]
        out_specs = pl.BlockSpec((bt, bm, bd), lambda b, i, d, k: (b, i, d))
        scratch_shapes = [pltpu.VMEM((bt, bm, bd), jnp.float32)]
        dim_sem = ("parallel", "parallel", "parallel", "arbitrary")

    return pl.pallas_call(
        kernel,
        out_shape=jax.ShapeDtypeStruct((B, N, D), out_dtype),
        grid_spec=pltpu.PrefetchScalarGridSpec(
            num_scalar_prefetch=0,
            grid=grid,
            in_specs=in_specs,
            out_specs=out_specs,
            scratch_shapes=scratch_shapes,
        ),
        compiler_params=pltpu.CompilerParams(
            dimension_semantics=dim_sem,
            vmem_limit_bytes=vmem_limit,
        ),
        cost_estimate=cost,
    )(A, features)


# ----------------------------------------------------------------------------
# Self-test
# ----------------------------------------------------------------------------
if __name__ == "__main__":
    key = jax.random.PRNGKey(0)
    k1, k2 = jax.random.split(key)

    B, N, D = 2, 16, 32  # small shapes: batch=2, nodes=16, hidden=32

    features = jax.random.normal(k1, (B, N, D), dtype=jnp.float32)
    # Row-normalized adjacency (typical "mean aggregator" input).
    A_raw = jax.random.uniform(k2, (B, N, N), dtype=jnp.float32)
    A = A_raw / jnp.sum(A_raw, axis=-1, keepdims=True)

    ref = jnp.einsum("bij,bjd->bid", A, features)

    # f32 path (exact semantics of torch.bmm in f32).
    out = jax.block_until_ready(mean_aggregator_forward(features, A))
    assert out.shape == (B, N, D)
    assert out.dtype == features.dtype
    assert jnp.allclose(out, ref, atol=1e-5, rtol=1e-5), "mismatch vs reference (f32)"

    # bf16 MXU path (in-kernel cast, f32 accumulation) — relaxed tolerance.
    out_bf16 = jax.block_until_ready(
        mean_aggregator_forward(features, A, compute_dtype=jnp.bfloat16))
    assert out_bf16.dtype == features.dtype
    assert jnp.allclose(out_bf16, ref, atol=2e-2, rtol=2e-2), "mismatch vs reference (bf16)"

    print("KERNEL_OK")
</pallas_src>

<mosaic_0001>
module attributes {stable_mosaic.version = 11 : i64} {
  func.func @kernel(%arg0: i32, %arg1: i32, %arg2: i32, %arg3: memref<2x16x16xf32, #tpu.memory_space<vmem>>, %arg4: memref<2x16x32xf32, #tpu.memory_space<vmem>>, %arg5: memref<2x16x32xf32, #tpu.memory_space<vmem>>) attributes {dimension_semantics = [#tpu.dimension_semantics<parallel>, #tpu.dimension_semantics<parallel>, #tpu.dimension_semantics<parallel>], iteration_bounds = array<i64: 1, 1, 1>, scalar_prefetch = 0 : i64, scratch_operands = 0 : i64, tpu.core_type = #tpu.core_type<tc>, window_params = [{transform_indices = @transform_0, window_bounds = array<i64: 2, 16, 16>}, {transform_indices = @transform_1, window_bounds = array<i64: 2, 16, 32>}, {transform_indices = @transform_2, window_bounds = array<i64: 2, 16, 32>}]} {
    %c0 = arith.constant 0 : index
    %c0_0 = arith.constant 0 : index
    %c0_1 = arith.constant 0 : index
    %0 = vector.load %arg3[%c0, %c0_0, %c0_1] : memref<2x16x16xf32, #tpu.memory_space<vmem>>, vector<2x16x16xf32>
    %c0_2 = arith.constant 0 : index
    %c0_3 = arith.constant 0 : index
    %c0_4 = arith.constant 0 : index
    %1 = vector.load %arg4[%c0_2, %c0_3, %c0_4] : memref<2x16x32xf32, #tpu.memory_space<vmem>>, vector<2x16x32xf32>
    "tpu.trace_start"() <{level = 10 : i32, message = "bij,bjd->bid"}> : () -> ()
    %cst = arith.constant dense<0.000000e+00> : vector<2x16x32xf32>
    %2 = tpu.matmul %0, %1, %cst {dimension_numbers = #tpu.dot_dimension_numbers<[2], [1], [1], [2], [0, 0, 0, 1, 1, 2], [0], [0]>} : vector<2x16x16xf32>, vector<2x16x32xf32>, vector<2x16x32xf32> -> vector<2x16x32xf32>
    "tpu.trace_stop"() : () -> ()
    %c0_5 = arith.constant 0 : index
    %c0_6 = arith.constant 0 : index
    %c0_7 = arith.constant 0 : index
    %3 = vector.load %arg5[%c0_5, %c0_6, %c0_7] : memref<2x16x32xf32, #tpu.memory_space<vmem>>, vector<2x16x32xf32>
    tpu.vector_store %arg5[%c0_5, %c0_6, %c0_7], %2 {strides = array<i32>} : memref<2x16x32xf32, #tpu.memory_space<vmem>>, vector<2x16x32xf32>,
    return
  }
  func.func @transform_0(%arg0: i32, %arg1: i32, %arg2: i32) -> (i32, i32, i32) {
    %c0_i32 = arith.constant 0 : i32
    %c0_i32_0 = arith.constant 0 : i32
    return %arg0, %arg1, %c0_i32 : i32, i32, i32
  }
  func.func @transform_1(%arg0: i32, %arg1: i32, %arg2: i32) -> (i32, i32, i32) {
    %c0_i32 = arith.constant 0 : i32
    %c0_i32_0 = arith.constant 0 : i32
    return %arg0, %c0_i32, %arg2 : i32, i32, i32
  }
  func.func @transform_2(%arg0: i32, %arg1: i32, %arg2: i32) -> (i32, i32, i32) {
    %c0_i32 = arith.constant 0 : i32
    return %arg0, %arg1, %arg2 : i32, i32, i32
  }
}

</mosaic_0001>

<llo_original>
// kernel: tpu_custom_call.1
$region0: #{tpu_custom_call.1}
  #allocation0 [shape = 'u32[]', space=smem, size = 0x4, offset = 0x4, fixed_abs, tag = 'smem constant byte address 0x4 - core index']
  #allocation1 [shape = 'u32[144,128]{1,0:T(1,128)}', space=vmem, size = 0x12000, scoped, tag = 'internal scratch']
  %s0 = inlined_call_operand.hbm [shape: f32[2,16,16], index: 0, kind: input, shape index: {}]
  %s1 = inlined_call_operand.hbm [shape: f32[2,16,32], index: 1, kind: input, shape index: {}]
  %s2 = inlined_call_operand.hbm [shape: f32[2,16,32], index: 2, kind: output, shape index: {}]
  %s3 = sld [smem:[#allocation0]]
  $region26: #{tpu_custom_call.1} parent=0
    _
  %s5 = ssub.s32 1, %s3
  %s6 = scalar_select 0, %s5, %s3
  $region1: #{tpu_custom_call.1} parent=0
    #allocation2 [shape = 'u8[16384]{0}', space=vmem, size = 0x4000, scoped, tag = 'input window, operand 0, single buffered']
    #allocation3 [shape = 's32[1]{0}', space=sflag, size = 0x4, scoped, tag = 'scoped memory for tpu_custom_call.1']
    #allocation4 [shape = 's32[1]{0}', space=sflag, size = 0x4, scoped, tag = 'scoped memory for tpu_custom_call.1']
    #allocation5 [shape = 'u8[16384]{0}', space=vmem, size = 0x4000, scoped, tag = 'input window, operand 1, single buffered']
    #allocation6 [shape = 's32[1]{0}', space=sflag, size = 0x4, scoped, tag = 'scoped memory for tpu_custom_call.1']
    #allocation7 [shape = 'u8[16384]{0}', space=vmem, size = 0x4000, scoped, tag = 'output window, operand 0, single buffered']
    %7 = vsyncpa [#allocation3], 0
    %8 = vsyncpa [#allocation6], 0
    %9 = vsyncpa [#allocation4], 0
    // Predicated region
    $region2: #{tpu_custom_call.1} parent=1 // pred_check
      _
    $region3: #{tpu_custom_call.1} parent=1 // pred_check_branch
      %11 = sbr.rel (0) target = $region5
    $region4: #{tpu_custom_call.1} parent=1 // pred_region
      %s13 = ssub.s32 512, 512
      %14 = vsyncadd [#allocation3], %s13
      %s15 = sshll.u32 [#allocation2], 4
      %s16 = int_to_ptr.vmem [resolvable:$true] %s15
      %21 = dma.hbm_to_vmem [thread:$0]  %s0, 512, %s16, [#allocation3], 128, 128, 8
    $region5: #{tpu_custom_call.1} parent=1 // pred_fallthru
      _
    // Predicated region
    $region6: #{tpu_custom_call.1} parent=1 // pred_check
      _
    $region7: #{tpu_custom_call.1} parent=1 // pred_check_branch
      %23 = sbr.rel (0) target = $region9
    $region8: #{tpu_custom_call.1} parent=1 // pred_region
      %s25 = ssub.s32 512, 512
      %26 = vsyncadd [#allocation6], %s25
      %s27 = sshll.u32 [#allocation5], 4
      %s28 = int_to_ptr.vmem [resolvable:$true] %s27
      %33 = dma.hbm_to_vmem [thread:$0]  %s1, 512, %s28, [#allocation6], 128, 128, 8
    $region9: #{tpu_custom_call.1} parent=1 // pred_fallthru
      _
    // Predicated region
    $region10: #{tpu_custom_call.1} parent=1 // pred_check
      _
    $region11: #{tpu_custom_call.1} parent=1 // pred_check_branch
      %35 = sbr.rel (0) target = $region13
    $region12: #{tpu_custom_call.1} parent=1 // pred_region
      %36 = dma.done [#allocation3], 512
    $region13: #{tpu_custom_call.1} parent=1 // pred_fallthru
      _
    // Predicated region
    $region14: #{tpu_custom_call.1} parent=1 // pred_check
      _
    $region15: #{tpu_custom_call.1} parent=1 // pred_check_branch
      %38 = sbr.rel (0) target = $region17
    $region16: #{tpu_custom_call.1} parent=1 // pred_region
      %39 = dma.done [#allocation6], 512
    $region17: #{tpu_custom_call.1} parent=1 // pred_fallthru
      _
    %v40 = vld [vmem:[#allocation2] sm:$0xff]
    %v41 = vld [vmem:[#allocation2 + $0x8] sm:$0xff]
    %v42 = vld [vmem:[#allocation2 + $0x10] sm:$0xff]
    %v43 = vld [vmem:[#allocation2 + $0x18] sm:$0xff]
    %v44 = vld [vmem:[#allocation5] sm:$0xff]
    %v45 = vld [vmem:[#allocation5 + $0x8] sm:$0xff]
    %v46 = vld [vmem:[#allocation5 + $0x10] sm:$0xff]
    %v47 = vld [vmem:[#allocation5 + $0x18] sm:$0xff]
    %vm48 = vcmask 130048
    %v50 = vsel %vm48, %v40, 0
    %v53 = vsel %vm48, %v41, 0
    %55 = vmatprep.subr.mxu0 0.0
    %56 = vmatpush1.msra.mxu0 %v44
    %57 = vmatprep.subr.mxu0 0.0
    %58 = vmatpush1.msra.mxu0 %v45
    %59 = vmatprep.subr.mxu0 0.0
    %60 = vmatpush1.msra.mxu0 0.0
    %61 = vmatprep.subr.mxu0 0.0
    %62 = vmatpush1.msra.mxu0 0.0
    %63 = vmatprep.subr.mxu0 0.0
    %64 = vmatpush1.msra.mxu0 0.0
    %65 = vmatprep.subr.mxu0 0.0
    %66 = vmatpush1.msra.mxu0 0.0
    %67 = vmatprep.subr.mxu0 0.0
    %68 = vmatpush1.msra.mxu0 0.0
    %69 = vmatprep.subr.mxu0 0.0
    %70 = vmatpush1.msra.mxu0 0.0
    %71 = vmatprep.subr.mxu0 0.0
    %72 = vmatpush1.msra.mxu0 0.0
    %73 = vmatprep.subr.mxu0 0.0
    %74 = vmatpush1.msra.mxu0 0.0
    %75 = vmatprep.subr.mxu0 0.0
    %76 = vmatpush1.msra.mxu0 0.0
    %77 = vmatprep.subr.mxu0 0.0
    %78 = vmatpush1.msra.mxu0 0.0
    %79 = vmatprep.subr.mxu0 0.0
    %80 = vmatpush1.msra.mxu0 0.0
    %81 = vmatprep.subr.mxu0 0.0
    %82 = vmatpush1.msra.mxu0 0.0
    %83 = vmatprep.subr.mxu0 0.0
    %84 = vmatpush1.msra.mxu0 0.0
    %85 = vmatprep.subr.mxu0 0.0
    %86 = vmatpush1.msra.mxu0 0.0
    %87 = vmatprep.subr.mxu0 0.0
    %88 = vmatpush1.msra.mxu0 0.0
    %89 = vmatprep.subr.mxu0 0.0
    %90 = vmatpush1.msra.mxu0 0.0
    %91 = vmatprep.subr.mxu0 0.0
    %92 = vmatpush1.msra.mxu0 0.0
    %93 = vmatprep.subr.mxu0 0.0
    %94 = vmatpush1.msra.mxu0 0.0
    %95 = vmatprep.subr.mxu0 0.0
    %96 = vmatpush1.msra.mxu0 0.0
    %97 = vmatprep.subr.mxu0 0.0
    %98 = vmatpush1.msra.mxu0 0.0
    %99 = vmatprep.subr.mxu0 0.0
    %100 = vmatpush1.msra.mxu0 0.0
    %101 = vmatprep.subr.mxu0 0.0
    %102 = vmatpush1.msra.mxu0 0.0
    %103 = vmatprep.subr.mxu0 0.0
    %104 = vmatpush1.msra.mxu0 0.0
    %105 = vmatprep.subr.mxu0 0.0
    %106 = vmatpush1.msra.mxu0 0.0
    %107 = vmatprep.subr.mxu0 0.0
    %108 = vmatpush1.msra.mxu0 0.0
    %109 = vmatprep.subr.mxu0 0.0
    %110 = vmatpush1.msra.mxu0 0.0
    %111 = vmatprep.subr.mxu0 0.0
    %112 = vmatpush1.msra.mxu0 0.0
    %113 = vmatprep.subr.mxu0 0.0
    %114 = vmatpush1.msra.mxu0 0.0
    %115 = vmatprep.subr.mxu0 0.0
    %116 = vmatpush1.msra.mxu0 0.0
    %117 = vmatprep.subr.mxu0 0.0
    %118 = vmatpush1.msra.mxu0 0.0
    %119 = vmatprep.mubr.f32.mxu0 0.0
    %120 = vmatmul.mubr.f32.gmra.mrb[0].mxu0 %v50
    %v121 = vpop.f32.mrb[0].mxu0
    %v122 = vadd.f32 0.0, %v121
    %v123 = vpop.f32.mrb[0].mxu0
    %124 = vmatprep.mubr.f32.mxu0 0.0
    %125 = vmatmul.mubr.f32.gmra.mrb[0].mxu0 %v53
    %v126 = vpop.f32.mrb[0].mxu0
    %v127 = vadd.f32 0.0, %v126
    %v128 = vpop.f32.mrb[0].mxu0
    %129 = vdwg.mxu0
    %v131 = vsel %vm48, %v42, 0
    %v134 = vsel %vm48, %v43, 0
    %136 = vmatprep.subr.mxu0 0.0
    %137 = vmatpush1.msra.mxu0 %v46
    %138 = vmatprep.subr.mxu0 0.0
    %139 = vmatpush1.msra.mxu0 %v47
    %140 = vmatprep.subr.mxu0 0.0
    %141 = vmatpush1.msra.mxu0 0.0
    %142 = vmatprep.subr.mxu0 0.0
    %143 = vmatpush1.msra.mxu0 0.0
    %144 = vmatprep.subr.mxu0 0.0
    %145 = vmatpush1.msra.mxu0 0.0
    %146 = vmatprep.subr.mxu0 0.0
    %147 = vmatpush1.msra.mxu0 0.0
    %148 = vmatprep.subr.mxu0 0.0
    %149 = vmatpush1.msra.mxu0 0.0
    %150 = vmatprep.subr.mxu0 0.0
    %151 = vmatpush1.msra.mxu0 0.0
    %152 = vmatprep.subr.mxu0 0.0
    %153 = vmatpush1.msra.mxu0 0.0
    %154 = vmatprep.subr.mxu0 0.0
    %155 = vmatpush1.msra.mxu0 0.0
    %156 = vmatprep.subr.mxu0 0.0
    %157 = vmatpush1.msra.mxu0 0.0
    %158 = vmatprep.subr.mxu0 0.0
    %159 = vmatpush1.msra.mxu0 0.0
    %160 = vmatprep.subr.mxu0 0.0
    %161 = vmatpush1.msra.mxu0 0.0
    %162 = vmatprep.subr.mxu0 0.0
    %163 = vmatpush1.msra.mxu0 0.0
    %164 = vmatprep.subr.mxu0 0.0
    %165 = vmatpush1.msra.mxu0 0.0
    %166 = vmatprep.subr.mxu0 0.0
    %167 = vmatpush1.msra.mxu0 0.0
    %168 = vmatprep.subr.mxu0 0.0
    %169 = vmatpush1.msra.mxu0 0.0
    %170 = vmatprep.subr.mxu0 0.0
    %171 = vmatpush1.msra.mxu0 0.0
    %172 = vmatprep.subr.mxu0 0.0
    %173 = vmatpush1.msra.mxu0 0.0
    %174 = vmatprep.subr.mxu0 0.0
    %175 = vmatpush1.msra.mxu0 0.0
    %176 = vmatprep.subr.mxu0 0.0
    %177 = vmatpush1.msra.mxu0 0.0
    %178 = vmatprep.subr.mxu0 0.0
    %179 = vmatpush1.msra.mxu0 0.0
    %180 = vmatprep.subr.mxu0 0.0
    %181 = vmatpush1.msra.mxu0 0.0
    %182 = vmatprep.subr.mxu0 0.0
    %183 = vmatpush1.msra.mxu0 0.0
    %184 = vmatprep.subr.mxu0 0.0
    %185 = vmatpush1.msra.mxu0 0.0
    %186 = vmatprep.subr.mxu0 0.0
    %187 = vmatpush1.msra.mxu0 0.0
    %188 = vmatprep.subr.mxu0 0.0
    %189 = vmatpush1.msra.mxu0 0.0
    %190 = vmatprep.subr.mxu0 0.0
    %191 = vmatpush1.msra.mxu0 0.0
    %192 = vmatprep.subr.mxu0 0.0
    %193 = vmatpush1.msra.mxu0 0.0
    %194 = vmatprep.subr.mxu0 0.0
    %195 = vmatpush1.msra.mxu0 0.0
    %196 = vmatprep.subr.mxu0 0.0
    %197 = vmatpush1.msra.mxu0 0.0
    %198 = vmatprep.subr.mxu0 0.0
    %199 = vmatpush1.msra.mxu0 0.0
    %200 = vmatprep.mubr.f32.mxu0 0.0
    %201 = vmatmul.mubr.f32.gmra.mrb[0].mxu0 %v131
    %v202 = vpop.f32.mrb[0].mxu0
    %v203 = vadd.f32 0.0, %v202
    %v204 = vpop.f32.mrb[0].mxu0
    %205 = vmatprep.mubr.f32.mxu0 0.0
    %206 = vmatmul.mubr.f32.gmra.mrb[0].mxu0 %v134
    %v207 = vpop.f32.mrb[0].mxu0
    %v208 = vadd.f32 0.0, %v207
    %v209 = vpop.f32.mrb[0].mxu0
    %210 = vdwg.mxu0
    %vm211 = vcmask 261120
    %212 = vst.msk [vmem:[#allocation7] sm:$0xff] %vm211, %v122
    %213 = vst.msk [vmem:[#allocation7 + $0x8] sm:$0xff] %vm211, %v127
    %214 = vst.msk [vmem:[#allocation7 + $0x10] sm:$0xff] %vm211, %v203
    %215 = vst.msk [vmem:[#allocation7 + $0x18] sm:$0xff] %vm211, %v208
    // Predicated region
    $region18: #{tpu_custom_call.1} parent=1 // pred_check
      _
    $region19: #{tpu_custom_call.1} parent=1 // pred_check_branch
      %217 = sbr.rel (0) target = $region21
    $region20: #{tpu_custom_call.1} parent=1 // pred_region
      %s219 = ssub.s32 512, 512
      %220 = vsyncadd [#allocation4], %s219
      %s221 = sshll.u32 [#allocation7], 4
      %s222 = int_to_ptr.vmem [resolvable:$true] %s221
      %227 = dma.vmem_to_hbm [thread:$0]  %s222, 512, %s2, [#allocation4], 128, 128, 8
    $region21: #{tpu_custom_call.1} parent=1 // pred_fallthru
      _
    // Predicated region
    $region22: #{tpu_custom_call.1} parent=1 // pred_check
      _
    $region23: #{tpu_custom_call.1} parent=1 // pred_check_branch
      %229 = sbr.rel (0) target = $region25
    $region24: #{tpu_custom_call.1} parent=1 // pred_region
      %230 = dma.done [#allocation4], 512
    $region25: #{tpu_custom_call.1} parent=1 // pred_fallthru
      _
    %231 = vsyncpa [#allocation3], 1
    %232 = vsyncpa [#allocation6], 1
    %233 = vsyncpa [#allocation4], 1

</llo_original>
